<compile_context>
chip_gen: v7x
topology: tpu7x:2x2x1
jax: 0.10.0
libtpu: 0.0.40
codegen_flags: <defaults>
</compile_context>

<pallas_src>
import math

import jax
import jax.numpy as jnp
import numpy as np
from jax.experimental import pallas as pl
from jax.experimental.pallas import tpu as pltpu


def _round_up(x: int, m: int) -> int:
    return (x + m - 1) // m * m


def _vmem_capacity_bytes() -> int:
    """Per-core VMEM capacity; conservative fallback = v7x's 64 MiB."""
    try:
        return int(pltpu.get_tpu_info().vmem_capacity_bytes)
    except Exception:
        return 64 << 20


def _choose_block_n(N: int, T: int, d: int, tok_bytes: int, mask_bytes: int,
                    w_bytes: int, out_bytes: int, vmem_budget_bytes: int) -> int:
    """Largest multiple-of-8 segment tile whose pipelined working set fits the
    generation-aware VMEM budget, while keeping >= 2 grid blocks (v7x 2 TCs)."""
    d_pad = _round_up(d, 128)      # lane padding of the hidden dim in VMEM
    t_sub = _round_up(T, 8)        # sublane padding of the segment-length dim
    # Per-row VMEM: double-buffered tok stream + elementwise temps in the tok
    # dtype + one f32 reduction temp + mask stream + f32 row temps + out stream.
    per_row = (2 * t_sub * d_pad * tok_bytes
               + 2 * t_sub * d_pad * tok_bytes
               + t_sub * d_pad * 4
               + 2 * _round_up(T, 128) * mask_bytes
               + 2 * d_pad * 4
               + 2 * d_pad * out_bytes)
    # Single-buffered (pl.Buffered(1)) W.T + f32 bias are resident once.
    resident = d * d_pad * w_bytes + d_pad * 4
    avail = max(vmem_budget_bytes - resident, 8 * per_row)
    bn = max(8, (avail // per_row) // 8 * 8)
    bn = min(bn, 512)                              # diminishing returns past ~512 rows
    # Keep at least 2 grid blocks when N > 8 so both v7x TensorCores are used.
    half = -(-N // 2)
    bn = min(bn, max(8, _round_up(half, 8)))
    return int(bn)
    # TODO(synk): for extreme T*d where even block_n=8 overflows v7x VMEM, a
    # streaming-softmax decomposition over T would be needed.


def _make_kernel(hidden_size: int):
    inv_sqrt_d = float(1.0 / math.sqrt(hidden_size))

    def kernel(tok_ref, mask_ref, wt_ref, b_ref, out_ref):
        # tok_ref  : (bn, T, d)   HBM dtype (f32/bf16), d on lanes
        # mask_ref : (bn, T)      bf16, lane-dense (0/1 exact in bf16)
        # wt_ref   : (d, d_pad)   W.T zero-padded on lanes, activation dtype
        # b_ref    : (1, d_pad)   f32
        # out_ref  : (bn, d_pad)  lane-dense output tile
        tok = tok_ref[...]                               # keep HBM dtype (no f32 copy)
        cdt = tok.dtype
        mask = mask_ref[...]                             # (bn, T) bf16
        mask_f = mask.astype(jnp.float32)

        # masked mean over T; f32 accumulation, exact divide
        denom = jnp.sum(mask_f, axis=1, keepdims=True) + 1e-6                 # (bn, 1)
        msum = jnp.sum(tok * mask.astype(cdt)[:, :, None], axis=1,
                       dtype=jnp.float32)                                     # (bn, d)
        avg = msum / denom                                                    # (bn, d) f32

        # scores = <tok, avg> / sqrt(d) + mask  — lane-dense (bn, T), f32 accum
        scores = jnp.sum(tok * avg.astype(cdt)[:, None, :], axis=-1,
                         dtype=jnp.float32)                                   # (bn, T)
        scores = scores * inv_sqrt_d + mask_f            # exact PyTorch: adds the 0/1 mask

        # softmax over T (shift-invariant; matches torch.softmax(dim=1))
        scores = scores - jnp.max(scores, axis=1, keepdims=True)
        e = jnp.exp(scores)
        p = e / jnp.sum(e, axis=1, keepdims=True)                             # (bn, T) f32

        # attention-weighted pooling (f32 accumulation)
        u = jnp.sum(tok * p.astype(cdt)[:, :, None], axis=1, dtype=jnp.float32)

        # dense epilogue on the MXU in the activation dtype: u @ W.T + b
        out = jnp.dot(u.astype(wt_ref.dtype), wt_ref[...],
                      preferred_element_type=jnp.float32)
        out = out + b_ref[...]
        out_ref[...] = out.astype(out_ref.dtype)
        # TODO(synk): for small d (<128) / small T, lanes are underfilled on the
        # elementwise + softmax paths; production shapes should keep d a
        # multiple of 128 or repack (fold T*d onto lanes).

    return kernel


def segment_pooler(token_states, attention_mask, weight, bias, *,
                   block_n=None, epilogue_dtype=None):
    """token_states: (N, T, d), attention_mask: (N, T), weight: (d, d), bias: (d,)."""
    N, T, d = token_states.shape
    out_dtype = token_states.dtype
    d_pad = _round_up(d, 128)
    tok_bytes = jnp.dtype(token_states.dtype).itemsize
    out_bytes = jnp.dtype(out_dtype).itemsize

    # Epilogue matmul runs in the activation dtype (bf16 for bf16 deployments,
    # per perf review); f32 inputs keep an f32 path for tight parity.
    if epilogue_dtype is None:
        epilogue_dtype = token_states.dtype
    w_bytes = jnp.dtype(epilogue_dtype).itemsize
    mask_bytes = 2  # bf16 over HBM

    # Generation-aware budgets: ~60% of per-core VMEM for the tile working set,
    # ~87% as the scoped VMEM limit (128 MiB on v5e/v6e, 64 MiB on v7x).
    vmem_cap = _vmem_capacity_bytes()
    vmem_budget = (vmem_cap * 3) // 5
    vmem_limit = (vmem_cap * 7) // 8

    if block_n is None:
        block_n = _choose_block_n(N, T, d, tok_bytes, mask_bytes, w_bytes,
                                  out_bytes, vmem_budget)
    block_n = max(8, (block_n // 8) * 8)

    # No remainder padding of the token stream: Pallas masks OOB stores of the
    # partial last block; each row is independent so garbage rows are harmless.
    mask2 = attention_mask.reshape(N, T).astype(jnp.bfloat16)   # 0/1 exact in bf16
    w_t = weight.T.astype(epilogue_dtype)                       # (d, d)
    b2 = bias.reshape(1, d).astype(jnp.float32)
    if d_pad != d:
        # Lane-dense output: zero-pad the dense weight/bias columns so the
        # stored last dim is a multiple of 128 (extra columns sliced off below).
        w_t = jnp.pad(w_t, ((0, 0), (0, d_pad - d)))
        b2 = jnp.pad(b2, ((0, 0), (0, d_pad - d)))

    grid = (pl.cdiv(N, block_n),)
    kernel = _make_kernel(d)

    cost = pl.CostEstimate(
        flops=N * (2 * d * d_pad + 6 * T * d),
        transcendentals=N * T,
        bytes_accessed=(N * T * d * tok_bytes        # tok (dominant stream)
                        + N * T * mask_bytes         # mask
                        + d * d_pad * w_bytes        # W.T (fetched once)
                        + d_pad * 4                  # bias
                        + N * d_pad * out_bytes),    # output
    )

    out = pl.pallas_call(
        kernel,
        out_shape=jax.ShapeDtypeStruct((N, d_pad), out_dtype),
        grid_spec=pltpu.PrefetchScalarGridSpec(
            num_scalar_prefetch=0,
            grid=grid,
            in_specs=[
                pl.BlockSpec((block_n, T, d), lambda i: (i, 0, 0)),
                pl.BlockSpec((block_n, T), lambda i: (i, 0)),
                # Constant-index weight/bias: single-buffered (no wasted 2nd buffer).
                pl.BlockSpec((d, d_pad), lambda i: (0, 0),
                             pipeline_mode=pl.Buffered(1)),
                pl.BlockSpec((1, d_pad), lambda i: (0, 0),
                             pipeline_mode=pl.Buffered(1)),
            ],
            out_specs=pl.BlockSpec((block_n, d_pad), lambda i: (i, 0)),
        ),
        compiler_params=pltpu.CompilerParams(
            # TODO(synk): on v7x, pltpu.CORE_PARALLEL could be used for explicit
            # 2-TC sharding; "parallel" + >=2 grid blocks kept for portability.
            dimension_semantics=("parallel",),
            vmem_limit_bytes=int(vmem_limit),
        ),
        cost_estimate=cost,
    )(token_states, mask2, w_t, b2)

    return out[:, :d]


def segment_pooler_ref(token_states, attention_mask, weight, bias):
    """Pure-JAX reference mirroring the PyTorch forward exactly."""
    N, T, d = token_states.shape
    mask = attention_mask.reshape(N, T, 1).astype(jnp.float32)
    tok = token_states.astype(jnp.float32)
    avg = jnp.sum(mask * tok, axis=1) / (1e-6 + jnp.sum(mask, axis=1))
    scores = jnp.einsum("ntd,nd->nt", tok, avg)[..., None] / math.sqrt(d)
    scores = scores + mask
    scores = jax.nn.softmax(scores, axis=1)
    u = jnp.sum(tok * scores, axis=1)
    return u @ weight.T.astype(jnp.float32) + bias.astype(jnp.float32)


if __name__ == "__main__":
    # Small shapes consistent with the module: B=2, S=8 segments, T=8 tokens, d=32
    B, S, T, d = 2, 8, 8, 32
    N = B * S

    key = jax.random.PRNGKey(0)
    k_tok, k_mask, k_w, k_b = jax.random.split(key, 4)

    token_states = jax.random.normal(k_tok, (N, T, d), dtype=jnp.float32)
    # 0/1 attention mask, guarantee at least one valid token per segment
    attention_mask = (jax.random.uniform(k_mask, (N, T)) > 0.3).astype(jnp.float32)
    attention_mask = attention_mask.at[:, 0].set(1.0)

    # Deterministic nn.Linear(d, d) init: U(-1/sqrt(d), 1/sqrt(d))
    bound = 1.0 / math.sqrt(d)
    weight = jax.random.uniform(k_w, (d, d), minval=-bound, maxval=bound, dtype=jnp.float32)
    bias = jax.random.uniform(k_b, (d,), minval=-bound, maxval=bound, dtype=jnp.float32)

    out = segment_pooler(token_states, attention_mask, weight, bias)
    out = jax.block_until_ready(out)

    ref = segment_pooler_ref(token_states, attention_mask, weight, bias)
    # Exact divisions restored (no approx reciprocals) -> tight tolerance.
    np.testing.assert_allclose(np.asarray(out), np.asarray(ref), rtol=1e-4, atol=1e-4)

    print("KERNEL_OK")
</pallas_src>

<mosaic_0001>
module attributes {stable_mosaic.version = 11 : i64} {
  func.func @kernel(%arg0: i32, %arg1: memref<8x8x32xf32, #tpu.memory_space<vmem>>, %arg2: memref<8x8xbf16, #tpu.memory_space<vmem>>, %arg3: memref<32x128xf32, #tpu.memory_space<vmem>>, %arg4: memref<1x128xf32, #tpu.memory_space<vmem>>, %arg5: memref<8x128xf32, #tpu.memory_space<vmem>>) attributes {dimension_semantics = [#tpu.dimension_semantics<parallel>], iteration_bounds = array<i64: 2>, scalar_prefetch = 0 : i64, scratch_operands = 0 : i64, tpu.core_type = #tpu.core_type<tc>, window_params = [{transform_indices = @transform_0, window_bounds = array<i64: 8, 8, 32>}, {transform_indices = @transform_1, window_bounds = array<i64: 8, 8>}, {pipeline_mode = #tpu.pipeline_mode<synchronous>, transform_indices = @transform_2, window_bounds = array<i64: 32, 128>}, {pipeline_mode = #tpu.pipeline_mode<synchronous>, transform_indices = @transform_3, window_bounds = array<i64: 1, 128>}, {transform_indices = @transform_4, window_bounds = array<i64: 8, 128>}]} {
    %c0 = arith.constant 0 : index
    %c0_0 = arith.constant 0 : index
    %c0_1 = arith.constant 0 : index
    %0 = vector.load %arg1[%c0, %c0_0, %c0_1] : memref<8x8x32xf32, #tpu.memory_space<vmem>>, vector<8x8x32xf32>
    %c0_2 = arith.constant 0 : index
    %c0_3 = arith.constant 0 : index
    %1 = vector.load %arg2[%c0_2, %c0_3] : memref<8x8xbf16, #tpu.memory_space<vmem>>, vector<8x8xbf16>
    %2 = arith.extf %1 : vector<8x8xbf16> to vector<8x8xf32>
    %cst = arith.constant dense<0.000000e+00> : vector<8xf32>
    %3 = vector.multi_reduction <add>, %2, %cst [1] : vector<8x8xf32> to vector<8xf32>
    %4 = vector.shape_cast %3 : vector<8xf32> to vector<8x1xf32>
    %cst_4 = arith.constant 9.99999997E-7 : f32
    %5 = vector.broadcast %cst_4 : f32 to vector<8x1xf32>
    %6 = arith.addf %4, %5 : vector<8x1xf32>
    %7 = arith.extf %1 : vector<8x8xbf16> to vector<8x8xf32>
    %8 = vector.shape_cast %7 : vector<8x8xf32> to vector<8x8x1xf32>
    %9 = vector.broadcast %8 : vector<8x8x1xf32> to vector<8x8x32xf32>
    %10 = arith.mulf %0, %9 : vector<8x8x32xf32>
    %cst_5 = arith.constant dense<0.000000e+00> : vector<8x32xf32>
    %11 = vector.multi_reduction <add>, %10, %cst_5 [1] : vector<8x8x32xf32> to vector<8x32xf32>
    %12 = vector.broadcast %6 : vector<8x1xf32> to vector<8x32xf32>
    %13 = arith.divf %11, %12 : vector<8x32xf32>
    %14 = vector.shape_cast %13 : vector<8x32xf32> to vector<8x1x32xf32>
    %15 = vector.broadcast %14 : vector<8x1x32xf32> to vector<8x8x32xf32>
    %16 = arith.mulf %0, %15 : vector<8x8x32xf32>
    %cst_6 = arith.constant dense<0.000000e+00> : vector<8x8xf32>
    %17 = vector.multi_reduction <add>, %16, %cst_6 [2] : vector<8x8x32xf32> to vector<8x8xf32>
    %cst_7 = arith.constant 0.176776692 : f32
    %18 = vector.broadcast %cst_7 : f32 to vector<8x8xf32>
    %19 = arith.mulf %17, %18 : vector<8x8xf32>
    %20 = arith.addf %19, %2 : vector<8x8xf32>
    %cst_8 = arith.constant dense<0xFF800000> : vector<8xf32>
    %21 = vector.multi_reduction <maximumf>, %20, %cst_8 [1] : vector<8x8xf32> to vector<8xf32>
    %22 = vector.shape_cast %21 : vector<8xf32> to vector<8x1xf32>
    %23 = vector.broadcast %22 : vector<8x1xf32> to vector<8x8xf32>
    %24 = arith.subf %20, %23 : vector<8x8xf32>
    %25 = math.exp %24 : vector<8x8xf32>
    %cst_9 = arith.constant dense<0.000000e+00> : vector<8xf32>
    %26 = vector.multi_reduction <add>, %25, %cst_9 [1] : vector<8x8xf32> to vector<8xf32>
    %27 = vector.shape_cast %26 : vector<8xf32> to vector<8x1xf32>
    %28 = vector.broadcast %27 : vector<8x1xf32> to vector<8x8xf32>
    %29 = arith.divf %25, %28 : vector<8x8xf32>
    %30 = vector.shape_cast %29 : vector<8x8xf32> to vector<8x8x1xf32>
    %31 = vector.broadcast %30 : vector<8x8x1xf32> to vector<8x8x32xf32>
    %32 = arith.mulf %0, %31 : vector<8x8x32xf32>
    %cst_10 = arith.constant dense<0.000000e+00> : vector<8x32xf32>
    %33 = vector.multi_reduction <add>, %32, %cst_10 [1] : vector<8x8x32xf32> to vector<8x32xf32>
    %c0_11 = arith.constant 0 : index
    %c0_12 = arith.constant 0 : index
    %34 = vector.load %arg3[%c0_11, %c0_12] : memref<32x128xf32, #tpu.memory_space<vmem>>, vector<32x128xf32>
    %cst_13 = arith.constant dense<0.000000e+00> : vector<8x128xf32>
    %35 = tpu.matmul %33, %34, %cst_13 {dimension_numbers = #tpu.dot_dimension_numbers<[1], [0], [0], [1], [0, 0, 1, 1], [], []>} : vector<8x32xf32>, vector<32x128xf32>, vector<8x128xf32> -> vector<8x128xf32>
    %c0_14 = arith.constant 0 : index
    %c0_15 = arith.constant 0 : index
    %36 = vector.load %arg4[%c0_14, %c0_15] : memref<1x128xf32, #tpu.memory_space<vmem>>, vector<1x128xf32>
    %37 = vector.broadcast %36 : vector<1x128xf32> to vector<8x128xf32>
    %38 = arith.addf %35, %37 : vector<8x128xf32>
    %c0_16 = arith.constant 0 : index
    %c0_17 = arith.constant 0 : index
    %39 = vector.load %arg5[%c0_16, %c0_17] : memref<8x128xf32, #tpu.memory_space<vmem>>, vector<8x128xf32>
    tpu.vector_store %arg5[%c0_16, %c0_17], %38 {strides = array<i32>} : memref<8x128xf32, #tpu.memory_space<vmem>>, vector<8x128xf32>,
    return
  }
  func.func @transform_0(%arg0: i32) -> (i32, i32, i32) {
    %c0_i32 = arith.constant 0 : i32
    %c0_i32_0 = arith.constant 0 : i32
    %c0_i32_1 = arith.constant 0 : i32
    return %arg0, %c0_i32, %c0_i32_0 : i32, i32, i32
  }
  func.func @transform_1(%arg0: i32) -> (i32, i32) {
    %c0_i32 = arith.constant 0 : i32
    %c0_i32_0 = arith.constant 0 : i32
    return %arg0, %c0_i32 : i32, i32
  }
  func.func @transform_2(%arg0: i32) -> (i32, i32) {
    %c0_i32 = arith.constant 0 : i32
    %c0_i32_0 = arith.constant 0 : i32
    %c0_i32_1 = arith.constant 0 : i32
    return %c0_i32, %c0_i32_0 : i32, i32
  }
  func.func @transform_3(%arg0: i32) -> (i32, i32) {
    %c0_i32 = arith.constant 0 : i32
    %c0_i32_0 = arith.constant 0 : i32
    %c0_i32_1 = arith.constant 0 : i32
    return %c0_i32, %c0_i32_0 : i32, i32
  }
  func.func @transform_4(%arg0: i32) -> (i32, i32) {
    %c0_i32 = arith.constant 0 : i32
    %c0_i32_0 = arith.constant 0 : i32
    return %arg0, %c0_i32 : i32, i32
  }
}

</mosaic_0001>

<llo_original>
// kernel: tpu_custom_call.1
$region0: #{tpu_custom_call.1}
  #allocation0 [shape = 'u32[]', space=smem, size = 0x4, offset = 0x4, fixed_abs, tag = 'smem constant byte address 0x4 - core index']
  #allocation1 [shape = 'u32[144,128]{1,0:T(1,128)}', space=vmem, size = 0x12000, scoped, tag = 'internal scratch']
  %s0 = inlined_call_operand.hbm [shape: f32[16,8,32], index: 0, kind: input, shape index: {}]
  %s1 = inlined_call_operand.vmem [shape: bf16[16,8], index: 1, kind: input, shape index: {}]
  %s2 = inlined_call_operand.hbm [shape: f32[32,128], index: 2, kind: input, shape index: {}]
  %s3 = inlined_call_operand.vmem [shape: f32[1,128], index: 3, kind: input, shape index: {}]
  %s4 = inlined_call_operand.hbm [shape: f32[16,128], index: 4, kind: output, shape index: {}]
  %s5 = sld [smem:[#allocation0]]
  $region57: #{tpu_custom_call.1} parent=0
    _
  %s7 = ssub.s32 1, %s5
  %s8 = scalar_select 0, %s7, %s5
  $region1: #{tpu_custom_call.1} parent=0
    #allocation2 [shape = 'u8[65536]{0}', space=vmem, size = 0x10000, scoped, tag = 'input window, operand 0']
    #allocation3 [shape = 's32[2]{0}', space=sflag, size = 0x8, scoped, tag = 'scoped memory for tpu_custom_call.1']
    #allocation4 [shape = 's32[2]{0}', space=sflag, size = 0x8, scoped, tag = 'scoped memory for tpu_custom_call.1']
    #allocation5 [shape = 'u8[16384]{0}', space=vmem, size = 0x4000, scoped, tag = 'input window, operand 2, single buffered']
    #allocation6 [shape = 's32[1]{0}', space=sflag, size = 0x4, scoped, tag = 'scoped memory for tpu_custom_call.1']
    #allocation7 [shape = 'u8[8192]{0}', space=vmem, size = 0x2000, scoped, tag = 'output window, operand 0']
    %9 = vsyncpa [#allocation3], 0
    %s10 = scalar_lea.sflag [#allocation3], 1
    %11 = vsyncpa %s10, 0
    %12 = vsyncpa [#allocation6], 0
    %13 = vsyncpa [#allocation4], 0
    %s14 = scalar_lea.sflag [#allocation4], 1
    %15 = vsyncpa %s14, 0
    loop: start=0, step=1, limit=4
    $region2: #{tpu_custom_call.1} parent=1 // loop_pre_header
      _
    $region3: #{tpu_custom_call.1} parent=1 // loop_header
      %s17 = sphi 0, %s21
      %p18 = scmp.ge.s32.totalorder %s17, 4
      %s27 = sphi 0, %s29
      %s30 = sphi 0, %s27
      %s31 = sphi 0, %s30
      %s47 = sphi 0, %s31
      %s53 = sphi 0, %s55
      %s56 = sphi 0, %s53
      %s57 = sphi 0, %s56
      %s73 = sphi 0, %s57
      %s77 = sphi 0, %s77
      %s79 = sphi 0, %s77
      %s80 = sphi 0, %s79
      %s94 = sphi 0, %s80
      %s98 = sphi 0, %s98
      %s100 = sphi 0, %s98
      %s101 = sphi 0, %s100
      %s115 = sphi 0, %s101
      %s121 = sphi 0, %s123
      %s124 = sphi 0, %s121
      %s125 = sphi 0, %s124
      %s141 = sphi 0, %s125
    $region4: #{tpu_custom_call.1} parent=1 // loop_header_branch
      %20 = sbr.rel (%p18) target = $region8
    $region5: #{tpu_custom_call.1} parent=1 // loop_body
      %s22 = ssub.s32 %s17, 1
      %s23 = ssub.s32 %s17, 2
      %s24 = sadd.s32 %s17, 1
      %s25 = ssub.s32 %s17, %s24
      %p26 = scmp.eq.s32.totalorder %s25, 0
      %s28 = sadd.s32 %s27, 1
      %s29 = scalar_select %p26, %s27, %s28
      %p32 = pneg %p26
      %p33 = scmp.eq.s32.totalorder %s17, 1
      %p34 = por %p32, %p33
      %p35 = scmp.ne.s32.totalorder %s27, %s30
      %p36 = scmp.eq.s32.totalorder %s17, 0
      %p37 = por %p35, %p36
      %p38 = scmp.ne.s32.totalorder %s27, %s30
      %p39 = scmp.eq.s32.totalorder %s22, 1
      %p40 = por %p38, %p39
      %p41 = scmp.ne.s32.totalorder %s30, %s31
      %p42 = scmp.eq.s32.totalorder %s22, 0
      %p43 = por %p41, %p42
      %p44 = scmp.ne.s32.totalorder %s30, %s31
      %p45 = scmp.eq.s32.totalorder %s23, 1
      %p46 = por %p44, %p45
      %p48 = scmp.ne.s32.totalorder %s31, %s47
      %p49 = scmp.eq.s32.totalorder %s23, 0
      %p50 = por %p48, %p49
      %s51 = ssub.s32 %s17, %s24
      %p52 = scmp.eq.s32.totalorder %s51, 0
      %s54 = sadd.s32 %s53, 1
      %s55 = scalar_select %p52, %s53, %s54
      %p58 = pneg %p52
      %p59 = scmp.eq.s32.totalorder %s17, 1
      %p60 = por %p58, %p59
      %p61 = scmp.ne.s32.totalorder %s53, %s56
      %p62 = scmp.eq.s32.totalorder %s17, 0
      %p63 = por %p61, %p62
      %p64 = scmp.ne.s32.totalorder %s53, %s56
      %p65 = scmp.eq.s32.totalorder %s22, 1
      %p66 = por %p64, %p65
      %p67 = scmp.ne.s32.totalorder %s56, %s57
      %p68 = scmp.eq.s32.totalorder %s22, 0
      %p69 = por %p67, %p68
      %p70 = scmp.ne.s32.totalorder %s56, %s57
      %p71 = scmp.eq.s32.totalorder %s23, 1
      %p72 = por %p70, %p71
      %p74 = scmp.ne.s32.totalorder %s57, %s73
      %p75 = scmp.eq.s32.totalorder %s23, 0
      %p76 = por %p74, %p75
      %s78 = sadd.s32 %s77, 1
      %p81 = scmp.eq.s32.totalorder %s17, 1
      %p82 = scmp.ne.s32.totalorder %s77, %s79
      %p83 = scmp.eq.s32.totalorder %s17, 0
      %p84 = por %p82, %p83
      %p85 = scmp.ne.s32.totalorder %s77, %s79
      %p86 = scmp.eq.s32.totalorder %s22, 1
      %p87 = por %p85, %p86
      %p88 = scmp.ne.s32.totalorder %s79, %s80
      %p89 = scmp.eq.s32.totalorder %s22, 0
      %p90 = por %p88, %p89
      %p91 = scmp.ne.s32.totalorder %s79, %s80
      %p92 = scmp.eq.s32.totalorder %s23, 1
      %p93 = por %p91, %p92
      %p95 = scmp.ne.s32.totalorder %s80, %s94
      %p96 = scmp.eq.s32.totalorder %s23, 0
      %p97 = por %p95, %p96
      %s99 = sadd.s32 %s98, 1
      %p102 = scmp.eq.s32.totalorder %s17, 1
      %p103 = scmp.ne.s32.totalorder %s98, %s100
      %p104 = scmp.eq.s32.totalorder %s17, 0
      %p105 = por %p103, %p104
      %p106 = scmp.ne.s32.totalorder %s98, %s100
      %p107 = scmp.eq.s32.totalorder %s22, 1
      %p108 = por %p106, %p107
      %p109 = scmp.ne.s32.totalorder %s100, %s101
      %p110 = scmp.eq.s32.totalorder %s22, 0
      %p111 = por %p109, %p110
      %p112 = scmp.ne.s32.totalorder %s100, %s101
      %p113 = scmp.eq.s32.totalorder %s23, 1
      %p114 = por %p112, %p113
      %p116 = scmp.ne.s32.totalorder %s101, %s115
      %p117 = scmp.eq.s32.totalorder %s23, 0
      %p118 = por %p116, %p117
      %s119 = ssub.s32 %s17, %s24
      %p120 = scmp.eq.s32.totalorder %s119, 0
      %s122 = sadd.s32 %s121, 1
      %s123 = scalar_select %p120, %s121, %s122
      %p126 = pneg %p120
      %p127 = scmp.eq.s32.totalorder %s17, 1
      %p128 = por %p126, %p127
      %p129 = scmp.ne.s32.totalorder %s121, %s124
      %p130 = scmp.eq.s32.totalorder %s17, 0
      %p131 = por %p129, %p130
      %p132 = scmp.ne.s32.totalorder %s121, %s124
      %p133 = scmp.eq.s32.totalorder %s22, 1
      %p134 = por %p132, %p133
      %p135 = scmp.ne.s32.totalorder %s124, %s125
      %p136 = scmp.eq.s32.totalorder %s22, 0
      %p137 = por %p135, %p136
      %p138 = scmp.ne.s32.totalorder %s124, %s125
      %p139 = scmp.eq.s32.totalorder %s23, 1
      %p140 = por %p138, %p139
      %p142 = scmp.ne.s32.totalorder %s125, %s141
      %p143 = scmp.eq.s32.totalorder %s23, 0
      %p144 = por %p142, %p143
      %p145 = scmp.le.s32.totalorder 1, %s17
      %p146 = scmp.lt.s32.totalorder %s17, 3
      %p147 = pnand %p145, %p146
      %p148 = pneg %p147
      // Predicated region
      $region9: #{tpu_custom_call.1} parent=5 // pred_check
        _
      $region10: #{tpu_custom_call.1} parent=5 // pred_check_branch
        %150 = sbr.rel (%p147) target = $region12
      $region11: #{tpu_custom_call.1} parent=5 // pred_region
        %s151 = ssub.s32 %s17, 1
        // Predicated region
        $region13: #{tpu_custom_call.1} parent=11 // pred_check
          %p152 = pneg %p90
        $region14: #{tpu_custom_call.1} parent=11 // pred_check_branch
          %154 = sbr.rel (%p152) target = $region16
        $region15: #{tpu_custom_call.1} parent=11 // pred_region
          %s156 = ssub.s32 512, 512
          %157 = vsyncadd [#allocation6], %s156
          %s158 = sshll.u32 [#allocation5], 4
          %s159 = int_to_ptr.vmem [resolvable:$true] %s158
          %164 = dma.hbm_to_vmem [thread:$0]  %s2, 512, %s159, [#allocation6], 128, 128, 8
        $region16: #{tpu_custom_call.1} parent=11 // pred_fallthru
          _
        // Predicated region
        $region17: #{tpu_custom_call.1} parent=11 // pred_check
          %p165 = pneg %p111
        $region18: #{tpu_custom_call.1} parent=11 // pred_check_branch
          %167 = sbr.rel (%p165) target = $region20
        $region19: #{tpu_custom_call.1} parent=11 // pred_region
          _
        $region20: #{tpu_custom_call.1} parent=11 // pred_fallthru
          _
      $region12: #{tpu_custom_call.1} parent=5 // pred_fallthru
        _
      %p168 = scmp.lt.s32.totalorder %s17, 2
      // Predicated region
      $region21: #{tpu_custom_call.1} parent=5 // pred_check
        %p169 = pneg %p168
      $region22: #{tpu_custom_call.1} parent=5 // pred_check_branch
        %171 = sbr.rel (%p169) target = $region24
      $region23: #{tpu_custom_call.1} parent=5 // pred_region
        // Predicated region
        $region25: #{tpu_custom_call.1} parent=23 // pred_check
          %p172 = pneg %p37
        $region26: #{tpu_custom_call.1} parent=23 // pred_check_branch
          %174 = sbr.rel (%p172) target = $region28
        $region27: #{tpu_custom_call.1} parent=23 // pred_region
          %s175 = sand.u32 %s27, 1
          %s176 = scalar_lea.sflag [#allocation3], %s175
          %s177 = sand.u32 %s27, 1
          %s178 = smul.addr %s177, 64
          %s179 = scalar_lea.vmem [#allocation2], %s178
          %s180 = smul.u32 8, %s17
          %s182 = ssub.s32 1024, 1024
          %183 = vsyncadd %s176, %s182
          %s184 = smul.addr %s180, 128
          %s185 = scalar_lea.hbm %s0, %s184
          %s186 = sshll.u32 %s179, 4
          %s187 = int_to_ptr.vmem [resolvable:$true] %s186
          %192 = dma.hbm_to_vmem [thread:$0]  %s185, 1024, %s187, %s176, 128, 128, 8
        $region28: #{tpu_custom_call.1} parent=23 // pred_fallthru
          _
        // Predicated region
        $region29: #{tpu_custom_call.1} parent=23 // pred_check
          %p193 = pneg %p63
        $region30: #{tpu_custom_call.1} parent=23 // pred_check_branch
          %195 = sbr.rel (%p193) target = $region32
        $region31: #{tpu_custom_call.1} parent=23 // pred_region
          %p196 = scmp.lt.s32.totalorder %s17, 1
          %s197 = scalar_select %p196, %s17, 1
          %s198 = smul.addr %s197, 4
          %s199 = scalar_lea.vmem %s1, %s198
        $region32: #{tpu_custom_call.1} parent=23 // pred_fallthru
          _
      $region24: #{tpu_custom_call.1} parent=5 // pred_fallthru
        _
      %p200 = scmp.le.s32.totalorder 1, %s17
      %p201 = scmp.lt.s32.totalorder %s17, 3
      %p202 = pnand %p200, %p201
      %p203 = pneg %p202
      // Predicated region
      $region33: #{tpu_custom_call.1} parent=5 // pred_check
        _
      $region34: #{tpu_custom_call.1} parent=5 // pred_check_branch
        %205 = sbr.rel (%p202) target = $region36
      $region35: #{tpu_custom_call.1} parent=5 // pred_region
        %s206 = ssub.s32 %s17, 1
        %s207 = sand.u32 %s30, 1
        %s208 = scalar_lea.sflag [#allocation3], %s207
        %s209 = sand.u32 %s30, 1
        %s210 = smul.addr %s209, 64
        %s211 = scalar_lea.vmem [#allocation2], %s210
        // Predicated region
        $region37: #{tpu_custom_call.1} parent=35 // pred_check
          %p212 = pneg %p43
        $region38: #{tpu_custom_call.1} parent=35 // pred_check_branch
          %214 = sbr.rel (%p212) target = $region40
        $region39: #{tpu_custom_call.1} parent=35 // pred_region
          %215 = dma.done %s208, 1024
        $region40: #{tpu_custom_call.1} parent=35 // pred_fallthru
          _
        // Predicated region
        $region41: #{tpu_custom_call.1} parent=35 // pred_check
          %p216 = pneg %p90
        $region42: #{tpu_custom_call.1} parent=35 // pred_check_branch
          %218 = sbr.rel (%p216) target = $region44
        $region43: #{tpu_custom_call.1} parent=35 // pred_region
          %219 = dma.done [#allocation6], 512
        $region44: #{tpu_custom_call.1} parent=35 // pred_fallthru
          _
        %s220 = sand.u32 %s30, 1
        %s221 = scalar_lea.sflag [#allocation3], %s220
        %s222 = sand.u32 %s30, 1
        %s223 = smul.addr %s222, 64
        %s224 = scalar_lea.vmem [#allocation2], %s223
        %p225 = pneg %p43
        %p226 = pneg %p40
        %p227 = scmp.lt.s32.totalorder %s22, 1
        %s228 = scalar_select %p227, %s22, 1
        %s229 = smul.addr %s228, 4
        %s230 = scalar_lea.vmem %s1, %s229
        %p231 = pneg %p69
        %p232 = pneg %p66
        %p233 = pneg %p90
        %p234 = pneg %p87
        %p235 = pneg %p111
        %p236 = pneg %p108
        %p237 = pneg %p137
        %p238 = pneg %p134
        %s239 = sand.u32 %s124, 1
        %s240 = scalar_lea.sflag [#allocation4], %s239
        %s241 = sand.u32 %s124, 1
        %s242 = smul.addr %s241, 8
        %s243 = scalar_lea.vmem [#allocation7], %s242
        %s244 = smul.u32 8, %s22
        %p245 = scmp.lt.s32.totalorder %s22, 1
        %s246 = scalar_select %p245, %s22, 1
        %s247 = smul.addr %s246, 4
        %s248 = scalar_lea.vmem %s1, %s247
        %v249 = vld [vmem:[%s211] sm:$0xff]
        %v250 = vld [vmem:[%s211 + $0x8] sm:$0xff]
        %v251 = vld [vmem:[%s211 + $0x10] sm:$0xff]
        %v252 = vld [vmem:[%s211 + $0x18] sm:$0xff]
        %v253 = vld [vmem:[%s211 + $0x20] sm:$0xff]
        %v254 = vld [vmem:[%s211 + $0x28] sm:$0xff]
        %v255 = vld [vmem:[%s211 + $0x30] sm:$0xff]
        %v256 = vld [vmem:[%s211 + $0x38] sm:$0xff]
        %v257 = vld [vmem:[%s248] sm:$0xf]
        %v258 = vunpack.c.l.bf16 %v257
        %vm259 = vcmask 64512
        %v260 = vsel %vm259, %v258, 0.0
        %261 = vadd.xlane.f32.xlu0 %v260
        %v262 = vpop.xlane.xlu0 %261
        %v263 = vadd.f32 %v262, 1e-06
        %v264 = vlaneseq
        %v265 = vshrl.u32 %v264, 7
        %v266 = vsub.s32 0, %v265
        %v267 = vrot.slane %v258, %v266
        %269 = vbcast.lane.b32.xlu0 %v267, 256
        %v270 = vpop.permute.xlu0 %269
        %v271 = vlaneseq
        %v272 = vshrl.u32 %v271, 7
        %v273 = vsub.s32 1, %v272
        %v274 = vrot.slane %v258, %v273
        %276 = vbcast.lane.b32.xlu0 %v274, 256
        %v277 = vpop.permute.xlu0 %276
        %v278 = vlaneseq
        %v279 = vshrl.u32 %v278, 7
        %v280 = vsub.s32 2, %v279
        %v281 = vrot.slane %v258, %v280
        %283 = vbcast.lane.b32.xlu0 %v281, 256
        %v284 = vpop.permute.xlu0 %283
        %v285 = vlaneseq
        %v286 = vshrl.u32 %v285, 7
        %v287 = vsub.s32 3, %v286
        %v288 = vrot.slane %v258, %v287
        %290 = vbcast.lane.b32.xlu0 %v288, 256
        %v291 = vpop.permute.xlu0 %290
        %v292 = vlaneseq
        %v293 = vshrl.u32 %v292, 7
        %v294 = vsub.s32 4, %v293
        %v295 = vrot.slane %v258, %v294
        %297 = vbcast.lane.b32.xlu0 %v295, 256
        %v298 = vpop.permute.xlu0 %297
        %v299 = vlaneseq
        %v300 = vshrl.u32 %v299, 7
        %v301 = vsub.s32 5, %v300
        %v302 = vrot.slane %v258, %v301
        %304 = vbcast.lane.b32.xlu0 %v302, 256
        %v305 = vpop.permute.xlu0 %304
        %v306 = vlaneseq
        %v307 = vshrl.u32 %v306, 7
        %v308 = vsub.s32 6, %v307
        %v309 = vrot.slane %v258, %v308
        %311 = vbcast.lane.b32.xlu0 %v309, 256
        %v312 = vpop.permute.xlu0 %311
        %v313 = vlaneseq
        %v314 = vshrl.u32 %v313, 7
        %v315 = vsub.s32 7, %v314
        %v316 = vrot.slane %v258, %v315
        %318 = vbcast.lane.b32.xlu0 %v316, 256
        %v319 = vpop.permute.xlu0 %318
        %v320 = vmul.f32 %v249, %v270
        %v321 = vmul.f32 %v250, %v277
        %v322 = vmul.f32 %v251, %v284
        %v323 = vmul.f32 %v252, %v291
        %v324 = vmul.f32 %v253, %v298
        %v325 = vmul.f32 %v254, %v305
        %v326 = vmul.f32 %v255, %v312
        %v327 = vmul.f32 %v256, %v319
        %vm328 = vcmask 261120
        %v329 = vsel %vm328, %v320, 0.0
        %v330 = vrot.slane %v329, 4
        %v331 = vadd.f32 %v329, %v330
        %v332 = vrot.slane %v331, 2
        %v333 = vadd.f32 %v331, %v332
        %v334 = vrot.slane %v333, 1
        %v335 = vadd.f32 %v333, %v334
        %v336 = vsel %vm328, %v321, 0.0
        %v337 = vrot.slane %v336, 4
        %v338 = vadd.f32 %v336, %v337
        %v339 = vrot.slane %v338, 2
        %v340 = vadd.f32 %v338, %v339
        %v341 = vrot.slane %v340, 1
        %v342 = vadd.f32 %v340, %v341
        %v343 = vsel %vm328, %v322, 0.0
        %v344 = vrot.slane %v343, 4
        %v345 = vadd.f32 %v343, %v344
        %v346 = vrot.slane %v345, 2
        %v347 = vadd.f32 %v345, %v346
        %v348 = vrot.slane %v347, 1
        %v349 = vadd.f32 %v347, %v348
        %v350 = vsel %vm328, %v323, 0.0
        %v351 = vrot.slane %v350, 4
        %v352 = vadd.f32 %v350, %v351
        %v353 = vrot.slane %v352, 2
        %v354 = vadd.f32 %v352, %v353
        %v355 = vrot.slane %v354, 1
        %v356 = vadd.f32 %v354, %v355
        %v357 = vsel %vm328, %v324, 0.0
        %v358 = vrot.slane %v357, 4
        %v359 = vadd.f32 %v357, %v358
        %v360 = vrot.slane %v359, 2
        %v361 = vadd.f32 %v359, %v360
        %v362 = vrot.slane %v361, 1
        %v363 = vadd.f32 %v361, %v362
        %v364 = vsel %vm328, %v325, 0.0
        %v365 = vrot.slane %v364, 4
        %v366 = vadd.f32 %v364, %v365
        %v367 = vrot.slane %v366, 2
        %v368 = vadd.f32 %v366, %v367
        %v369 = vrot.slane %v368, 1
        %v370 = vadd.f32 %v368, %v369
        %v371 = vsel %vm328, %v326, 0.0
        %v372 = vrot.slane %v371, 4
        %v373 = vadd.f32 %v371, %v372
        %v374 = vrot.slane %v373, 2
        %v375 = vadd.f32 %v373, %v374
        %v376 = vrot.slane %v375, 1
        %v377 = vadd.f32 %v375, %v376
        %v378 = vsel %vm328, %v327, 0.0
        %v379 = vrot.slane %v378, 4
        %v380 = vadd.f32 %v378, %v379
        %v381 = vrot.slane %v380, 2
        %v382 = vadd.f32 %v380, %v381
        %v383 = vrot.slane %v382, 1
        %v384 = vadd.f32 %v382, %v383
        %v386 = vrot.slane %v263, 1
        %v387 = vrot.slane %v263, 2
        %v388 = vrot.slane %v263, 3
        %v389 = vrot.slane %v263, 4
        %v390 = vrot.slane %v263, 5
        %v391 = vrot.slane %v263, 6
        %v392 = vrot.slane %v263, 7
        %v401 = vrcp.pop %v263
        %v402 = vmul.f32 %v335, %v401
        %v403 = vrcp.pop %v386
        %v404 = vmul.f32 %v342, %v403
        %v405 = vrcp.pop %v387
        %v406 = vmul.f32 %v349, %v405
        %v407 = vrcp.pop %v388
        %v408 = vmul.f32 %v356, %v407
        %v409 = vrcp.pop %v389
        %v410 = vmul.f32 %v363, %v409
        %v411 = vrcp.pop %v390
        %v412 = vmul.f32 %v370, %v411
        %v413 = vrcp.pop %v391
        %v414 = vmul.f32 %v377, %v413
        %v415 = vrcp.pop %v392
        %v416 = vmul.f32 %v384, %v415
        %v417 = vlaneseq
        %v418 = vshrl.u32 %v417, 7
        %v419 = vsub.s32 0, %v418
        %v420 = vrot.slane %v402, %v419
        %v421 = vlaneseq
        %v422 = vshrl.u32 %v421, 7
        %v423 = vsub.s32 0, %v422
        %v424 = vrot.slane %v404, %v423
        %v425 = vlaneseq
        %v426 = vshrl.u32 %v425, 7
        %v427 = vsub.s32 0, %v426
        %v428 = vrot.slane %v406, %v427
        %v429 = vlaneseq
        %v430 = vshrl.u32 %v429, 7
        %v431 = vsub.s32 0, %v430
        %v432 = vrot.slane %v408, %v431
        %v433 = vlaneseq
        %v434 = vshrl.u32 %v433, 7
        %v435 = vsub.s32 0, %v434
        %v436 = vrot.slane %v410, %v435
        %v437 = vlaneseq
        %v438 = vshrl.u32 %v437, 7
        %v439 = vsub.s32 0, %v438
        %v440 = vrot.slane %v412, %v439
        %v441 = vlaneseq
        %v442 = vshrl.u32 %v441, 7
        %v443 = vsub.s32 0, %v442
        %v444 = vrot.slane %v414, %v443
        %v445 = vlaneseq
        %v446 = vshrl.u32 %v445, 7
        %v447 = vsub.s32 0, %v446
        %v448 = vrot.slane %v416, %v447
        %v449 = vmul.f32 %v249, %v420
        %v450 = vmul.f32 %v250, %v424
        %v451 = vmul.f32 %v251, %v428
        %v452 = vmul.f32 %v252, %v432
        %v453 = vmul.f32 %v253, %v436
        %v454 = vmul.f32 %v254, %v440
        %v455 = vmul.f32 %v255, %v444
        %v456 = vmul.f32 %v256, %v448
        %v457 = vsel %vm328, %v449, 0.0
        %458 = vadd.xlane.f32.xlu0 %v457
        %v459 = vpop.xlane.xlu0 %458
        %v460 = vsel %vm328, %v450, 0.0
        %461 = vadd.xlane.f32.xlu0 %v460
        %v462 = vpop.xlane.xlu0 %461
        %v463 = vsel %vm328, %v451, 0.0
        %464 = vadd.xlane.f32.xlu0 %v463
        %v465 = vpop.xlane.xlu0 %464
        %v466 = vsel %vm328, %v452, 0.0
        %467 = vadd.xlane.f32.xlu0 %v466
        %v468 = vpop.xlane.xlu0 %467
        %v469 = vsel %vm328, %v453, 0.0
        %470 = vadd.xlane.f32.xlu0 %v469
        %v471 = vpop.xlane.xlu0 %470
        %v472 = vsel %vm328, %v454, 0.0
        %473 = vadd.xlane.f32.xlu0 %v472
        %v474 = vpop.xlane.xlu0 %473
        %v475 = vsel %vm328, %v455, 0.0
        %476 = vadd.xlane.f32.xlu0 %v475
        %v477 = vpop.xlane.xlu0 %476
        %v478 = vsel %vm328, %v456, 0.0
        %479 = vadd.xlane.f32.xlu0 %v478
        %v480 = vpop.xlane.xlu0 %479
        %v481 = vmul.f32 %v459, 0.17677669
        %v482 = vmul.f32 %v462, 0.17677669
        %v483 = vmul.f32 %v465, 0.17677669
        %v484 = vmul.f32 %v468, 0.17677669
        %v485 = vmul.f32 %v471, 0.17677669
        %v486 = vmul.f32 %v474, 0.17677669
        %v487 = vmul.f32 %v477, 0.17677669
        %v488 = vmul.f32 %v480, 0.17677669
        %v490 = vlaneseq
        %v491 = vshrl.u32 %v490, 7
        %v492 = vsub.s32 0, %v491
        %v493 = vrot.slane %v258, %v492
        %495 = vbcast.lane.b32.xlu0 %v493, 256
        %v496 = vpop.permute.xlu0 %495
        %v497 = vlaneseq
        %v498 = vshrl.u32 %v497, 7
        %v499 = vsub.s32 1, %v498
        %v500 = vrot.slane %v258, %v499
        %502 = vbcast.lane.b32.xlu0 %v500, 256
        %v503 = vpop.permute.xlu0 %502
        %v504 = vlaneseq
        %v505 = vshrl.u32 %v504, 7
        %v506 = vsub.s32 2, %v505
        %v507 = vrot.slane %v258, %v506
        %509 = vbcast.lane.b32.xlu0 %v507, 256
        %v510 = vpop.permute.xlu0 %509
        %v511 = vlaneseq
        %v512 = vshrl.u32 %v511, 7
        %v513 = vsub.s32 3, %v512
        %v514 = vrot.slane %v258, %v513
        %516 = vbcast.lane.b32.xlu0 %v514, 256
        %v517 = vpop.permute.xlu0 %516
        %v518 = vlaneseq
        %v519 = vshrl.u32 %v518, 7
        %v520 = vsub.s32 4, %v519
        %v521 = vrot.slane %v258, %v520
        %523 = vbcast.lane.b32.xlu0 %v521, 256
        %v524 = vpop.permute.xlu0 %523
        %v525 = vlaneseq
        %v526 = vshrl.u32 %v525, 7
        %v527 = vsub.s32 5, %v526
        %v528 = vrot.slane %v258, %v527
        %530 = vbcast.lane.b32.xlu0 %v528, 256
        %v531 = vpop.permute.xlu0 %530
        %v532 = vlaneseq
        %v533 = vshrl.u32 %v532, 7
        %v534 = vsub.s32 6, %v533
        %v535 = vrot.slane %v258, %v534
        %537 = vbcast.lane.b32.xlu0 %v535, 256
        %v538 = vpop.permute.xlu0 %537
        %v539 = vlaneseq
        %v540 = vshrl.u32 %v539, 7
        %v541 = vsub.s32 7, %v540
        %v542 = vrot.slane %v258, %v541
        %544 = vbcast.lane.b32.xlu0 %v542, 256
        %v545 = vpop.permute.xlu0 %544
        %v554 = vadd.f32 %v481, %v496
        %v555 = vadd.f32 %v482, %v503
        %v556 = vadd.f32 %v483, %v510
        %v557 = vadd.f32 %v484, %v517
        %v558 = vadd.f32 %v485, %v524
        %v559 = vadd.f32 %v486, %v531
        %v560 = vadd.f32 %v487, %v538
        %v561 = vadd.f32 %v488, %v545
        %570 = vset.pattern.permute.xlu0 0
        %571 = vperm.xlu0 %570, %v554
        %v572 = vpop.permute.xlu0 %571
        %573 = vset.pattern.permute.xlu0 0
        %574 = vperm.xlu0 %573, %v555
        %v575 = vpop.permute.xlu0 %574
        %576 = vset.pattern.permute.xlu0 0
        %577 = vperm.xlu0 %576, %v556
        %v578 = vpop.permute.xlu0 %577
        %579 = vset.pattern.permute.xlu0 0
        %580 = vperm.xlu0 %579, %v557
        %v581 = vpop.permute.xlu0 %580
        %582 = vset.pattern.permute.xlu0 0
        %583 = vperm.xlu0 %582, %v558
        %v584 = vpop.permute.xlu0 %583
        %585 = vset.pattern.permute.xlu0 0
        %586 = vperm.xlu0 %585, %v559
        %v587 = vpop.permute.xlu0 %586
        %588 = vset.pattern.permute.xlu0 0
        %589 = vperm.xlu0 %588, %v560
        %v590 = vpop.permute.xlu0 %589
        %591 = vset.pattern.permute.xlu0 0
        %592 = vperm.xlu0 %591, %v561
        %v593 = vpop.permute.xlu0 %592
        %v594 = vlaneseq
        %v595 = vand.u32 %v594, 127
        %v596 = vlaneseq
        %v597 = vshrl.u32 %v596, 7
        %v598 = vsub.s32 %v595, %v597
        %v599 = vrot.slane %v572, %v598
        %v600 = vlaneseq
        %v601 = vshrl.u32 %v600, 7
        %v602 = vsub.s32 %v595, %v601
        %v603 = vrot.slane %v575, %v602
        %v604 = vlaneseq
        %v605 = vshrl.u32 %v604, 7
        %v606 = vsub.s32 %v595, %v605
        %v607 = vrot.slane %v578, %v606
        %v608 = vlaneseq
        %v609 = vshrl.u32 %v608, 7
        %v610 = vsub.s32 %v595, %v609
        %v611 = vrot.slane %v581, %v610
        %v612 = vlaneseq
        %v613 = vshrl.u32 %v612, 7
        %v614 = vsub.s32 %v595, %v613
        %v615 = vrot.slane %v584, %v614
        %v616 = vlaneseq
        %v617 = vshrl.u32 %v616, 7
        %v618 = vsub.s32 %v595, %v617
        %v619 = vrot.slane %v587, %v618
        %v620 = vlaneseq
        %v621 = vshrl.u32 %v620, 7
        %v622 = vsub.s32 %v595, %v621
        %v623 = vrot.slane %v590, %v622
        %v624 = vlaneseq
        %v625 = vshrl.u32 %v624, 7
        %v626 = vsub.s32 %v595, %v625
        %v627 = vrot.slane %v593, %v626
        %vm628 = vcmask 1041409
        %v629 = vsel %vm628, %v603, %v599
        %vm630 = vcmask 1042434
        %v631 = vsel %vm630, %v607, %v629
        %vm632 = vcmask 1043459
        %v633 = vsel %vm632, %v611, %v631
        %vm634 = vcmask 1044484
        %v635 = vsel %vm634, %v615, %v633
        %vm636 = vcmask 1045509
        %v637 = vsel %vm636, %v619, %v635
        %vm638 = vcmask 1046534
        %v639 = vsel %vm638, %v623, %v637
        %vm640 = vcmask 1047559
        %v641 = vsel %vm640, %v627, %v639
        %v643 = vsel %vm259, %v641, -inf
        %644 = vmax.xlane.f32.xlu0 %v643
        %v645 = vpop.xlane.xlu0 %644
        %v647 = vlaneseq
        %v648 = vshrl.u32 %v647, 7
        %v649 = vsub.s32 0, %v648
        %v650 = vrot.slane %v645, %v649
        %v651 = vlaneseq
        %v652 = vshrl.u32 %v651, 7
        %v653 = vsub.s32 1, %v652
        %v654 = vrot.slane %v645, %v653
        %v655 = vlaneseq
        %v656 = vshrl.u32 %v655, 7
        %v657 = vsub.s32 2, %v656
        %v658 = vrot.slane %v645, %v657
        %v659 = vlaneseq
        %v660 = vshrl.u32 %v659, 7
        %v661 = vsub.s32 3, %v660
        %v662 = vrot.slane %v645, %v661
        %v663 = vlaneseq
        %v664 = vshrl.u32 %v663, 7
        %v665 = vsub.s32 4, %v664
        %v666 = vrot.slane %v645, %v665
        %v667 = vlaneseq
        %v668 = vshrl.u32 %v667, 7
        %v669 = vsub.s32 5, %v668
        %v670 = vrot.slane %v645, %v669
        %v671 = vlaneseq
        %v672 = vshrl.u32 %v671, 7
        %v673 = vsub.s32 6, %v672
        %v674 = vrot.slane %v645, %v673
        %v675 = vlaneseq
        %v676 = vshrl.u32 %v675, 7
        %v677 = vsub.s32 7, %v676
        %v678 = vrot.slane %v645, %v677
        %v687 = vsub.f32 %v554, %v650
        %v688 = vsub.f32 %v555, %v654
        %v689 = vsub.f32 %v556, %v658
        %v690 = vsub.f32 %v557, %v662
        %v691 = vsub.f32 %v558, %v666
        %v692 = vsub.f32 %v559, %v670
        %v693 = vsub.f32 %v560, %v674
        %v694 = vsub.f32 %v561, %v678
        %v695 = vmul.f32 %v687, 1.442695
        %v696 = vpow.pop %v695
        %v697 = vmul.f32 %v688, 1.442695
        %v698 = vpow.pop %v697
        %v699 = vmul.f32 %v689, 1.442695
        %v700 = vpow.pop %v699
        %v701 = vmul.f32 %v690, 1.442695
        %v702 = vpow.pop %v701
        %v703 = vmul.f32 %v691, 1.442695
        %v704 = vpow.pop %v703
        %v705 = vmul.f32 %v692, 1.442695
        %v706 = vpow.pop %v705
        %v707 = vmul.f32 %v693, 1.442695
        %v708 = vpow.pop %v707
        %v709 = vmul.f32 %v694, 1.442695
        %v710 = vpow.pop %v709
        %719 = vset.pattern.permute.xlu0 0
        %720 = vperm.xlu0 %719, %v696
        %v721 = vpop.permute.xlu0 %720
        %722 = vset.pattern.permute.xlu0 0
        %723 = vperm.xlu0 %722, %v698
        %v724 = vpop.permute.xlu0 %723
        %725 = vset.pattern.permute.xlu0 0
        %726 = vperm.xlu0 %725, %v700
        %v727 = vpop.permute.xlu0 %726
        %728 = vset.pattern.permute.xlu0 0
        %729 = vperm.xlu0 %728, %v702
        %v730 = vpop.permute.xlu0 %729
        %731 = vset.pattern.permute.xlu0 0
        %732 = vperm.xlu0 %731, %v704
        %v733 = vpop.permute.xlu0 %732
        %734 = vset.pattern.permute.xlu0 0
        %735 = vperm.xlu0 %734, %v706
        %v736 = vpop.permute.xlu0 %735
        %737 = vset.pattern.permute.xlu0 0
        %738 = vperm.xlu0 %737, %v708
        %v739 = vpop.permute.xlu0 %738
        %740 = vset.pattern.permute.xlu0 0
        %741 = vperm.xlu0 %740, %v710
        %v742 = vpop.permute.xlu0 %741
        %v743 = vlaneseq
        %v744 = vshrl.u32 %v743, 7
        %v745 = vsub.s32 %v595, %v744
        %v746 = vrot.slane %v721, %v745
        %v747 = vlaneseq
        %v748 = vshrl.u32 %v747, 7
        %v749 = vsub.s32 %v595, %v748
        %v750 = vrot.slane %v724, %v749
        %v751 = vlaneseq
        %v752 = vshrl.u32 %v751, 7
        %v753 = vsub.s32 %v595, %v752
        %v754 = vrot.slane %v727, %v753
        %v755 = vlaneseq
        %v756 = vshrl.u32 %v755, 7
        %v757 = vsub.s32 %v595, %v756
        %v758 = vrot.slane %v730, %v757
        %v759 = vlaneseq
        %v760 = vshrl.u32 %v759, 7
        %v761 = vsub.s32 %v595, %v760
        %v762 = vrot.slane %v733, %v761
        %v763 = vlaneseq
        %v764 = vshrl.u32 %v763, 7
        %v765 = vsub.s32 %v595, %v764
        %v766 = vrot.slane %v736, %v765
        %v767 = vlaneseq
        %v768 = vshrl.u32 %v767, 7
        %v769 = vsub.s32 %v595, %v768
        %v770 = vrot.slane %v739, %v769
        %v771 = vlaneseq
        %v772 = vshrl.u32 %v771, 7
        %v773 = vsub.s32 %v595, %v772
        %v774 = vrot.slane %v742, %v773
        %v775 = vsel %vm628, %v750, %v746
        %v776 = vsel %vm630, %v754, %v775
        %v777 = vsel %vm632, %v758, %v776
        %v778 = vsel %vm634, %v762, %v777
        %v779 = vsel %vm636, %v766, %v778
        %v780 = vsel %vm638, %v770, %v779
        %v781 = vsel %vm640, %v774, %v780
        %v783 = vsel %vm259, %v781, 0.0
        %784 = vadd.xlane.f32.xlu0 %v783
        %v785 = vpop.xlane.xlu0 %784
        %v787 = vlaneseq
        %v788 = vshrl.u32 %v787, 7
        %v789 = vsub.s32 0, %v788
        %v790 = vrot.slane %v785, %v789
        %v791 = vlaneseq
        %v792 = vshrl.u32 %v791, 7
        %v793 = vsub.s32 1, %v792
        %v794 = vrot.slane %v785, %v793
        %v795 = vlaneseq
        %v796 = vshrl.u32 %v795, 7
        %v797 = vsub.s32 2, %v796
        %v798 = vrot.slane %v785, %v797
        %v799 = vlaneseq
        %v800 = vshrl.u32 %v799, 7
        %v801 = vsub.s32 3, %v800
        %v802 = vrot.slane %v785, %v801
        %v803 = vlaneseq
        %v804 = vshrl.u32 %v803, 7
        %v805 = vsub.s32 4, %v804
        %v806 = vrot.slane %v785, %v805
        %v807 = vlaneseq
        %v808 = vshrl.u32 %v807, 7
        %v809 = vsub.s32 5, %v808
        %v810 = vrot.slane %v785, %v809
        %v811 = vlaneseq
        %v812 = vshrl.u32 %v811, 7
        %v813 = vsub.s32 6, %v812
        %v814 = vrot.slane %v785, %v813
        %v815 = vlaneseq
        %v816 = vshrl.u32 %v815, 7
        %v817 = vsub.s32 7, %v816
        %v818 = vrot.slane %v785, %v817
        %v827 = vrcp.pop %v790
        %v828 = vmul.f32 %v696, %v827
        %v829 = vrcp.pop %v794
        %v830 = vmul.f32 %v698, %v829
        %v831 = vrcp.pop %v798
        %v832 = vmul.f32 %v700, %v831
        %v833 = vrcp.pop %v802
        %v834 = vmul.f32 %v702, %v833
        %v835 = vrcp.pop %v806
        %v836 = vmul.f32 %v704, %v835
        %v837 = vrcp.pop %v810
        %v838 = vmul.f32 %v706, %v837
        %v839 = vrcp.pop %v814
        %v840 = vmul.f32 %v708, %v839
        %v841 = vrcp.pop %v818
        %v842 = vmul.f32 %v710, %v841
        %844 = vset.pattern.permute.xlu0 0
        %845 = vperm.xlu0 %844, %v828
        %v846 = vpop.permute.xlu0 %845
        %849 = vset.pattern.permute.xlu0 0
        %850 = vperm.xlu0 %849, %v830
        %v851 = vpop.permute.xlu0 %850
        %854 = vset.pattern.permute.xlu0 0
        %855 = vperm.xlu0 %854, %v832
        %v856 = vpop.permute.xlu0 %855
        %859 = vset.pattern.permute.xlu0 0
        %860 = vperm.xlu0 %859, %v834
        %v861 = vpop.permute.xlu0 %860
        %864 = vset.pattern.permute.xlu0 0
        %865 = vperm.xlu0 %864, %v836
        %v866 = vpop.permute.xlu0 %865
        %869 = vset.pattern.permute.xlu0 0
        %870 = vperm.xlu0 %869, %v838
        %v871 = vpop.permute.xlu0 %870
        %874 = vset.pattern.permute.xlu0 0
        %875 = vperm.xlu0 %874, %v840
        %v876 = vpop.permute.xlu0 %875
        %879 = vset.pattern.permute.xlu0 0
        %880 = vperm.xlu0 %879, %v842
        %v881 = vpop.permute.xlu0 %880
        %v883 = vmul.f32 %v249, %v846
        %v884 = vmul.f32 %v250, %v851
        %v885 = vmul.f32 %v251, %v856
        %v886 = vmul.f32 %v252, %v861
        %v887 = vmul.f32 %v253, %v866
        %v888 = vmul.f32 %v254, %v871
        %v889 = vmul.f32 %v255, %v876
        %v890 = vmul.f32 %v256, %v881
        %v891 = vsel %vm328, %v883, 0.0
        %v892 = vrot.slane %v891, 4
        %v893 = vadd.f32 %v891, %v892
        %v894 = vrot.slane %v893, 2
        %v895 = vadd.f32 %v893, %v894
        %v896 = vrot.slane %v895, 1
        %v897 = vadd.f32 %v895, %v896
        %v898 = vsel %vm328, %v884, 0.0
        %v899 = vrot.slane %v898, 4
        %v900 = vadd.f32 %v898, %v899
        %v901 = vrot.slane %v900, 2
        %v902 = vadd.f32 %v900, %v901
        %v903 = vrot.slane %v902, 1
        %v904 = vadd.f32 %v902, %v903
        %v905 = vsel %vm328, %v885, 0.0
        %v906 = vrot.slane %v905, 4
        %v907 = vadd.f32 %v905, %v906
        %v908 = vrot.slane %v907, 2
        %v909 = vadd.f32 %v907, %v908
        %v910 = vrot.slane %v909, 1
        %v911 = vadd.f32 %v909, %v910
        %v912 = vsel %vm328, %v886, 0.0
        %v913 = vrot.slane %v912, 4
        %v914 = vadd.f32 %v912, %v913
        %v915 = vrot.slane %v914, 2
        %v916 = vadd.f32 %v914, %v915
        %v917 = vrot.slane %v916, 1
        %v918 = vadd.f32 %v916, %v917
        %v919 = vsel %vm328, %v887, 0.0
        %v920 = vrot.slane %v919, 4
        %v921 = vadd.f32 %v919, %v920
        %v922 = vrot.slane %v921, 2
        %v923 = vadd.f32 %v921, %v922
        %v924 = vrot.slane %v923, 1
        %v925 = vadd.f32 %v923, %v924
        %v926 = vsel %vm328, %v888, 0.0
        %v927 = vrot.slane %v926, 4
        %v928 = vadd.f32 %v926, %v927
        %v929 = vrot.slane %v928, 2
        %v930 = vadd.f32 %v928, %v929
        %v931 = vrot.slane %v930, 1
        %v932 = vadd.f32 %v930, %v931
        %v933 = vsel %vm328, %v889, 0.0
        %v934 = vrot.slane %v933, 4
        %v935 = vadd.f32 %v933, %v934
        %v936 = vrot.slane %v935, 2
        %v937 = vadd.f32 %v935, %v936
        %v938 = vrot.slane %v937, 1
        %v939 = vadd.f32 %v937, %v938
        %v940 = vsel %vm328, %v890, 0.0
        %v941 = vrot.slane %v940, 4
        %v942 = vadd.f32 %v940, %v941
        %v943 = vrot.slane %v942, 2
        %v944 = vadd.f32 %v942, %v943
        %v945 = vrot.slane %v944, 1
        %v946 = vadd.f32 %v944, %v945
        %v947 = vld [vmem:[#allocation5] sm:$0xff]
        %v948 = vld [vmem:[#allocation5 + $0x8] sm:$0xff]
        %v949 = vld [vmem:[#allocation5 + $0x10] sm:$0xff]
        %v950 = vld [vmem:[#allocation5 + $0x18] sm:$0xff]
        %v951 = vld [vmem:[%s3] sm:$0x1]
        %v953 = vlaneseq
        %v954 = vshrl.u32 %v953, 7
        %v955 = vsub.s32 0, %v954
        %v956 = vrot.slane %v951, %v955
        %v966 = vsel %vm628, %v904, %v897
        %v967 = vsel %vm630, %v911, %v966
        %v968 = vsel %vm632, %v918, %v967
        %v969 = vsel %vm634, %v925, %v968
        %v970 = vsel %vm636, %v932, %v969
        %v971 = vsel %vm638, %v939, %v970
        %v972 = vsel %vm640, %v946, %v971
        %v973 = vsel %vm328, %v972, 0
        %975 = vmatprep.subr.mxu0 0.0
        %976 = vmatpush1.msra.mxu0 %v947
        %977 = vmatprep.subr.mxu0 0.0
        %978 = vmatpush1.msra.mxu0 %v948
        %979 = vmatprep.subr.mxu0 0.0
        %980 = vmatpush1.msra.mxu0 %v949
        %981 = vmatprep.subr.mxu0 0.0
        %982 = vmatpush1.msra.mxu0 %v950
        %983 = vmatprep.subr.mxu0 0.0
        %984 = vmatpush1.msra.mxu0 0.0
        %985 = vmatprep.subr.mxu0 0.0
        %986 = vmatpush1.msra.mxu0 0.0
        %987 = vmatprep.subr.mxu0 0.0
        %988 = vmatpush1.msra.mxu0 0.0
        %989 = vmatprep.subr.mxu0 0.0
        %990 = vmatpush1.msra.mxu0 0.0
        %991 = vmatprep.subr.mxu0 0.0
        %992 = vmatpush1.msra.mxu0 0.0
        %993 = vmatprep.subr.mxu0 0.0
        %994 = vmatpush1.msra.mxu0 0.0
        %995 = vmatprep.subr.mxu0 0.0
        %996 = vmatpush1.msra.mxu0 0.0
        %997 = vmatprep.subr.mxu0 0.0
        %998 = vmatpush1.msra.mxu0 0.0
        %999 = vmatprep.subr.mxu0 0.0
        %1000 = vmatpush1.msra.mxu0 0.0
        %1001 = vmatprep.subr.mxu0 0.0
        %1002 = vmatpush1.msra.mxu0 0.0
        %1003 = vmatprep.subr.mxu0 0.0
        %1004 = vmatpush1.msra.mxu0 0.0
        %1005 = vmatprep.subr.mxu0 0.0
        %1006 = vmatpush1.msra.mxu0 0.0
        %1007 = vmatprep.subr.mxu0 0.0
        %1008 = vmatpush1.msra.mxu0 0.0
        %1009 = vmatprep.subr.mxu0 0.0
        %1010 = vmatpush1.msra.mxu0 0.0
        %1011 = vmatprep.subr.mxu0 0.0
        %1012 = vmatpush1.msra.mxu0 0.0
        %1013 = vmatprep.subr.mxu0 0.0
        %1014 = vmatpush1.msra.mxu0 0.0
        %1015 = vmatprep.subr.mxu0 0.0
        %1016 = vmatpush1.msra.mxu0 0.0
        %1017 = vmatprep.subr.mxu0 0.0
        %1018 = vmatpush1.msra.mxu0 0.0
        %1019 = vmatprep.subr.mxu0 0.0
        %1020 = vmatpush1.msra.mxu0 0.0
        %1021 = vmatprep.subr.mxu0 0.0
        %1022 = vmatpush1.msra.mxu0 0.0
        %1023 = vmatprep.subr.mxu0 0.0
        %1024 = vmatpush1.msra.mxu0 0.0
        %1025 = vmatprep.subr.mxu0 0.0
        %1026 = vmatpush1.msra.mxu0 0.0
        %1027 = vmatprep.subr.mxu0 0.0
        %1028 = vmatpush1.msra.mxu0 0.0
        %1029 = vmatprep.subr.mxu0 0.0
        %1030 = vmatpush1.msra.mxu0 0.0
        %1031 = vmatprep.subr.mxu0 0.0
        %1032 = vmatpush1.msra.mxu0 0.0
        %1033 = vmatprep.subr.mxu0 0.0
        %1034 = vmatpush1.msra.mxu0 0.0
        %1035 = vmatprep.subr.mxu0 0.0
        %1036 = vmatpush1.msra.mxu0 0.0
        %1037 = vmatprep.subr.mxu0 0.0
        %1038 = vmatpush1.msra.mxu0 0.0
        %1039 = vmatprep.mubr.f32.mxu0 0.0
        %1040 = vmatmul.mubr.f32.gmra.mrb[0].mxu0 %v973
        %v1041 = vpop.f32.mrb[0].mxu0
        %v1042 = vadd.f32 %v956, %v1041
        %v1043 = vpop.f32.mrb[0].mxu0
        %1044 = vdwg.mxu0
        %1045 = vst [vmem:[%s243] sm:$0xff] %v1042
        %s1046 = sand.u32 %s124, 1
        %s1047 = scalar_lea.sflag [#allocation4], %s1046
        %s1048 = sand.u32 %s124, 1
        %s1049 = smul.addr %s1048, 8
        %s1050 = scalar_lea.vmem [#allocation7], %s1049
        // Predicated region
        $region45: #{tpu_custom_call.1} parent=35 // pred_check
          %p1051 = pneg %p134
        $region46: #{tpu_custom_call.1} parent=35 // pred_check_branch
          %1053 = sbr.rel (%p1051) target = $region48
        $region47: #{tpu_custom_call.1} parent=35 // pred_region
          %s1055 = ssub.s32 128, 128
          %1056 = vsyncadd %s1047, %s1055
          %s1057 = smul.addr %s22, 128
          %s1058 = scalar_lea.hbm %s4, %s1057
          %s1060 = sshll.u32 %s1050, 4
          %s1061 = int_to_ptr.vmem [resolvable:$true] %s1060
          %1063 = dma.vmem_to_hbm [thread:$0]  %s1061, 128, %s1058, %s1047
        $region48: #{tpu_custom_call.1} parent=35 // pred_fallthru
          _
      $region36: #{tpu_custom_call.1} parent=5 // pred_fallthru
        _
      %p1064 = scmp.le.s32.totalorder 2, %s17
      // Predicated region
      $region49: #{tpu_custom_call.1} parent=5 // pred_check
        %p1065 = pneg %p1064
      $region50: #{tpu_custom_call.1} parent=5 // pred_check_branch
        %1067 = sbr.rel (%p1065) target = $region52
      $region51: #{tpu_custom_call.1} parent=5 // pred_region
        %s1068 = ssub.s32 %s17, 2
        // Predicated region
        $region53: #{tpu_custom_call.1} parent=51 // pred_check
          %p1069 = pneg %p140
        $region54: #{tpu_custom_call.1} parent=51 // pred_check_branch
          %1071 = sbr.rel (%p1069) target = $region56
        $region55: #{tpu_custom_call.1} parent=51 // pred_region
          %s1072 = sand.u32 %s125, 1
          %s1073 = scalar_lea.sflag [#allocation4], %s1072
          %s1074 = sand.u32 %s125, 1
          %s1075 = smul.addr %s1074, 8
          %s1076 = scalar_lea.vmem [#allocation7], %s1075
          %1077 = dma.done %s1073, 128
        $region56: #{tpu_custom_call.1} parent=51 // pred_fallthru
          _
      $region52: #{tpu_custom_call.1} parent=5 // pred_fallthru
        _
    $region6: #{tpu_custom_call.1} parent=1 // loop_footer
      %s21 = sadd.s32 1, %s17
    $region7: #{tpu_custom_call.1} parent=1 // loop_footer_branch
      %16 = sbr.rel target = $region3
    $region8: #{tpu_custom_call.1} parent=1 // loop_exit
      _
    %1078 = vsyncpa [#allocation3], 1
    %s1079 = scalar_lea.sflag [#allocation3], 1
    %1080 = vsyncpa %s1079, 1
    %1081 = vsyncpa [#allocation6], 1
    %1082 = vsyncpa [#allocation4], 1
    %s1083 = scalar_lea.sflag [#allocation4], 1
    %1084 = vsyncpa %s1083, 1

</llo_original>
